<compile_context>
chip_gen: v6e
topology: v6e:2x2x1
jax: 0.10.0
libtpu: 0.0.40
codegen_flags: <defaults>
</compile_context>

<pallas_src>
import jax
import jax.numpy as jnp
from jax.experimental import pallas as pl
from jax.experimental.pallas import tpu as pltpu


_SUBLANES = 8
_LANES = 128
_CHUNK = _SUBLANES * _LANES          # 1024 f32 elements == one full vreg tile
_MAX_TILE_LANES = 64 * 1024          # (8, 65536) f32 block = 2 MiB per buffer


def _make_sum_kernel(n_inputs):
    """Kernel summing n_inputs same-shape VMEM tiles into one output tile."""

    def kernel(*refs):
        out_ref = refs[n_inputs]
        acc = refs[0][...]
        for i in range(1, n_inputs):      # static unroll over inputs (VPU adds)
            acc = acc + refs[i][...]
        out_ref[...] = acc                # single unmasked lane-dense store

    return kernel


def _pallas_sum_same_shape(arrays):
    """Elementwise sum of same-shape, same-dtype arrays via one Pallas call."""
    n = len(arrays)
    shape = arrays[0].shape
    dtype = arrays[0].dtype
    total = int(arrays[0].size)

    # Flatten to a lane-dense (8, L) slab, L a multiple of 128.
    padded = -(-total // _CHUNK) * _CHUNK
    lanes = padded // _SUBLANES
    if lanes > _MAX_TILE_LANES:
        # Large inputs: tile the lane axis; pad so the tile divides evenly.
        tile_lanes = _MAX_TILE_LANES
        padded = -(-total // (_SUBLANES * tile_lanes)) * (_SUBLANES * tile_lanes)
        lanes = padded // _SUBLANES
    else:
        tile_lanes = lanes                # small case: single block, grid=(1,)
    num_tiles = lanes // tile_lanes

    flats = []
    for a in arrays:
        f = a.reshape(-1)
        if padded != total:               # only materialize padding if required
            f = jnp.pad(f, (0, padded - total))
        flats.append(f.reshape(_SUBLANES, lanes))

    out2d = pl.pallas_call(
        _make_sum_kernel(n),
        out_shape=jax.ShapeDtypeStruct((_SUBLANES, lanes), dtype),
        grid=(num_tiles,),
        in_specs=[pl.BlockSpec((_SUBLANES, tile_lanes), lambda i: (0, i))] * n,
        out_specs=pl.BlockSpec((_SUBLANES, tile_lanes), lambda i: (0, i)),
        compiler_params=pltpu.CompilerParams(
            dimension_semantics=("parallel",),   # shards across TCs on v7x if >1 tile
        ),
    )(*flats)

    flat_out = out2d.reshape(-1)
    if padded != total:
        flat_out = flat_out[:total]
    return flat_out.reshape(shape)


class Sum:
    """JAX/Pallas port of mart.nn.Sum: forward(*args) -> sum(args)."""

    def __call__(self, *args):
        if len(args) == 0:
            return 0                      # Python sum() of an empty sequence
        if len(args) == 1:
            return args[0]                # 0 + x == x
        # Broadcasting / dtype promotion handled at the boundary (glue only).
        out_shape = jnp.broadcast_shapes(*(jnp.shape(a) for a in args))
        out_dtype = jnp.result_type(*args)
        arrays = [
            jnp.broadcast_to(jnp.asarray(a, out_dtype), out_shape)
            for a in args
        ]
        return _pallas_sum_same_shape(arrays)


if __name__ == "__main__":
    key = jax.random.PRNGKey(0)
    k0, k1, k2 = jax.random.split(key, 3)
    shape = (2, 4, 16, 16)
    a = jax.random.normal(k0, shape, jnp.float32)
    b = jax.random.normal(k1, shape, jnp.float32)
    c = jax.random.normal(k2, shape, jnp.float32)

    module = Sum()
    out = module(a, b, c)
    out = jax.block_until_ready(out)
    assert out.shape == shape

    ref = a + b + c
    assert jnp.allclose(out, ref, atol=1e-6, rtol=1e-6), "mismatch vs reference"

    print("KERNEL_OK")
</pallas_src>

<mosaic_0001>
module attributes {stable_mosaic.version = 11 : i64} {
  func.func @kernel(%arg0: i32, %arg1: memref<8x256xf32, #tpu.memory_space<vmem>>, %arg2: memref<8x256xf32, #tpu.memory_space<vmem>>, %arg3: memref<8x256xf32, #tpu.memory_space<vmem>>, %arg4: memref<8x256xf32, #tpu.memory_space<vmem>>) attributes {dimension_semantics = [#tpu.dimension_semantics<parallel>], iteration_bounds = array<i64: 1>, scalar_prefetch = 0 : i64, scratch_operands = 0 : i64, tpu.core_type = #tpu.core_type<tc>, window_params = [{transform_indices = @transform_0, window_bounds = array<i64: 8, 256>}, {transform_indices = @transform_1, window_bounds = array<i64: 8, 256>}, {transform_indices = @transform_2, window_bounds = array<i64: 8, 256>}, {transform_indices = @transform_3, window_bounds = array<i64: 8, 256>}]} {
    %c0 = arith.constant 0 : index
    %c0_0 = arith.constant 0 : index
    %0 = vector.load %arg1[%c0, %c0_0] : memref<8x256xf32, #tpu.memory_space<vmem>>, vector<8x256xf32>
    %c0_1 = arith.constant 0 : index
    %c0_2 = arith.constant 0 : index
    %1 = vector.load %arg2[%c0_1, %c0_2] : memref<8x256xf32, #tpu.memory_space<vmem>>, vector<8x256xf32>
    %2 = arith.addf %0, %1 : vector<8x256xf32>
    %c0_3 = arith.constant 0 : index
    %c0_4 = arith.constant 0 : index
    %3 = vector.load %arg3[%c0_3, %c0_4] : memref<8x256xf32, #tpu.memory_space<vmem>>, vector<8x256xf32>
    %4 = arith.addf %2, %3 : vector<8x256xf32>
    %c0_5 = arith.constant 0 : index
    %c0_6 = arith.constant 0 : index
    %5 = vector.load %arg4[%c0_5, %c0_6] : memref<8x256xf32, #tpu.memory_space<vmem>>, vector<8x256xf32>
    tpu.vector_store %arg4[%c0_5, %c0_6], %4 {strides = array<i32>} : memref<8x256xf32, #tpu.memory_space<vmem>>, vector<8x256xf32>,
    return
  }
  func.func @transform_0(%arg0: i32) -> (i32, i32) {
    %c0_i32 = arith.constant 0 : i32
    %c0_i32_0 = arith.constant 0 : i32
    return %c0_i32, %arg0 : i32, i32
  }
  func.func @transform_1(%arg0: i32) -> (i32, i32) {
    %c0_i32 = arith.constant 0 : i32
    %c0_i32_0 = arith.constant 0 : i32
    return %c0_i32, %arg0 : i32, i32
  }
  func.func @transform_2(%arg0: i32) -> (i32, i32) {
    %c0_i32 = arith.constant 0 : i32
    %c0_i32_0 = arith.constant 0 : i32
    return %c0_i32, %arg0 : i32, i32
  }
  func.func @transform_3(%arg0: i32) -> (i32, i32) {
    %c0_i32 = arith.constant 0 : i32
    %c0_i32_0 = arith.constant 0 : i32
    return %c0_i32, %arg0 : i32, i32
  }
}

</mosaic_0001>

<llo_original>
// kernel: tpu_custom_call.1
$region0: #{tpu_custom_call.1}
  #allocation0 [shape = 'u32[]', space=smem, size = 0x4, offset = 0x4, fixed_abs, tag = 'smem constant byte address 0x4 - core index']
  #allocation1 [shape = 'u32[144,128]{1,0:T(1,128)}', space=vmem, size = 0x12000, scoped, tag = 'internal scratch']
  %s0 = inlined_call_operand.hbm [shape: f32[8,256], index: 0, kind: input, shape index: {}]
  %s1 = inlined_call_operand.hbm [shape: f32[8,256], index: 1, kind: input, shape index: {}]
  %s2 = inlined_call_operand.hbm [shape: f32[8,256], index: 2, kind: input, shape index: {}]
  %s3 = inlined_call_operand.hbm [shape: f32[8,256], index: 3, kind: output, shape index: {}]
  %s4 = sld [smem:[#allocation0]]
  $region34: #{tpu_custom_call.1} parent=0
    _
  %s6 = ssub.s32 1, %s4
  %s7 = scalar_select 0, %s6, %s4
  $region1: #{tpu_custom_call.1} parent=0
    #allocation2 [shape = 'u8[8192]{0}', space=vmem, size = 0x2000, scoped, tag = 'input window, operand 0, single buffered']
    #allocation3 [shape = 's32[1]{0}', space=sflag, size = 0x4, scoped, tag = 'scoped memory for tpu_custom_call.1']
    #allocation4 [shape = 's32[1]{0}', space=sflag, size = 0x4, scoped, tag = 'scoped memory for tpu_custom_call.1']
    #allocation5 [shape = 'u8[8192]{0}', space=vmem, size = 0x2000, scoped, tag = 'input window, operand 1, single buffered']
    #allocation6 [shape = 's32[1]{0}', space=sflag, size = 0x4, scoped, tag = 'scoped memory for tpu_custom_call.1']
    #allocation7 [shape = 'u8[8192]{0}', space=vmem, size = 0x2000, scoped, tag = 'input window, operand 2, single buffered']
    #allocation8 [shape = 'u8[8192]{0}', space=vmem, size = 0x2000, scoped, tag = 'output window, operand 0, single buffered']
    %8 = vsyncpa [#allocation3], 0
    %9 = vsyncpa [#allocation6], 0
    %10 = vsyncpa [#allocation4], 0
    // Predicated region
    $region2: #{tpu_custom_call.1} parent=1 // pred_check
      _
    $region3: #{tpu_custom_call.1} parent=1 // pred_check_branch
      %12 = sbr.rel (0) target = $region5
    $region4: #{tpu_custom_call.1} parent=1 // pred_region
      %s14 = ssub.s32 256, 256
      %15 = vsyncadd [#allocation3], %s14
      %s17 = sshll.u32 [#allocation2], 4
      %s18 = int_to_ptr.vmem [resolvable:$true] %s17
      %20 = dma.hbm_to_vmem [thread:$0]  %s0, 256, %s18, [#allocation3]
    $region5: #{tpu_custom_call.1} parent=1 // pred_fallthru
      _
    // Predicated region
    $region6: #{tpu_custom_call.1} parent=1 // pred_check
      _
    $region7: #{tpu_custom_call.1} parent=1 // pred_check_branch
      %22 = sbr.rel (0) target = $region9
    $region8: #{tpu_custom_call.1} parent=1 // pred_region
      %s24 = ssub.s32 256, 256
      %25 = vsyncadd [#allocation6], %s24
      %s27 = sshll.u32 [#allocation5], 4
      %s28 = int_to_ptr.vmem [resolvable:$true] %s27
      %30 = dma.hbm_to_vmem [thread:$0]  %s1, 256, %s28, [#allocation6]
    $region9: #{tpu_custom_call.1} parent=1 // pred_fallthru
      _
    // Predicated region
    $region10: #{tpu_custom_call.1} parent=1 // pred_check
      _
    $region11: #{tpu_custom_call.1} parent=1 // pred_check_branch
      %32 = sbr.rel (0) target = $region13
    $region12: #{tpu_custom_call.1} parent=1 // pred_region
      %s34 = ssub.s32 256, 256
      %35 = vsyncadd [#allocation6], %s34
      %s37 = sshll.u32 [#allocation7], 4
      %s38 = int_to_ptr.vmem [resolvable:$true] %s37
      %40 = dma.hbm_to_vmem [thread:$0]  %s2, 256, %s38, [#allocation6]
    $region13: #{tpu_custom_call.1} parent=1 // pred_fallthru
      _
    // Predicated region
    $region14: #{tpu_custom_call.1} parent=1 // pred_check
      _
    $region15: #{tpu_custom_call.1} parent=1 // pred_check_branch
      %42 = sbr.rel (0) target = $region17
    $region16: #{tpu_custom_call.1} parent=1 // pred_region
      %43 = dma.done [#allocation3], 256
    $region17: #{tpu_custom_call.1} parent=1 // pred_fallthru
      _
    // Predicated region
    $region18: #{tpu_custom_call.1} parent=1 // pred_check
      _
    $region19: #{tpu_custom_call.1} parent=1 // pred_check_branch
      %45 = sbr.rel (0) target = $region21
    $region20: #{tpu_custom_call.1} parent=1 // pred_region
      %46 = dma.done [#allocation6], 256
    $region21: #{tpu_custom_call.1} parent=1 // pred_fallthru
      _
    // Predicated region
    $region22: #{tpu_custom_call.1} parent=1 // pred_check
      _
    $region23: #{tpu_custom_call.1} parent=1 // pred_check_branch
      %48 = sbr.rel (0) target = $region25
    $region24: #{tpu_custom_call.1} parent=1 // pred_region
      %49 = dma.done [#allocation6], 256
    $region25: #{tpu_custom_call.1} parent=1 // pred_fallthru
      _
    %v50 = vld [vmem:[#allocation2] sm:$0xff]
    %v51 = vld [vmem:[#allocation2 + $0x8] sm:$0xff]
    %v52 = vld [vmem:[#allocation5] sm:$0xff]
    %v53 = vld [vmem:[#allocation5 + $0x8] sm:$0xff]
    %v54 = vadd.f32 %v50, %v52
    %v55 = vadd.f32 %v51, %v53
    %v56 = vld [vmem:[#allocation7] sm:$0xff]
    %v57 = vld [vmem:[#allocation7 + $0x8] sm:$0xff]
    %v58 = vadd.f32 %v54, %v56
    %v59 = vadd.f32 %v55, %v57
    %60 = vst [vmem:[#allocation8] sm:$0xff] %v58
    %61 = vst [vmem:[#allocation8 + $0x8] sm:$0xff] %v59
    // Predicated region
    $region26: #{tpu_custom_call.1} parent=1 // pred_check
      _
    $region27: #{tpu_custom_call.1} parent=1 // pred_check_branch
      %63 = sbr.rel (0) target = $region29
    $region28: #{tpu_custom_call.1} parent=1 // pred_region
      %s65 = ssub.s32 256, 256
      %66 = vsyncadd [#allocation4], %s65
      %s68 = sshll.u32 [#allocation8], 4
      %s69 = int_to_ptr.vmem [resolvable:$true] %s68
      %71 = dma.vmem_to_hbm [thread:$0]  %s69, 256, %s3, [#allocation4]
    $region29: #{tpu_custom_call.1} parent=1 // pred_fallthru
      _
    // Predicated region
    $region30: #{tpu_custom_call.1} parent=1 // pred_check
      _
    $region31: #{tpu_custom_call.1} parent=1 // pred_check_branch
      %73 = sbr.rel (0) target = $region33
    $region32: #{tpu_custom_call.1} parent=1 // pred_region
      %74 = dma.done [#allocation4], 256
    $region33: #{tpu_custom_call.1} parent=1 // pred_fallthru
      _
    %75 = vsyncpa [#allocation3], 1
    %76 = vsyncpa [#allocation6], 1
    %77 = vsyncpa [#allocation4], 1

</llo_original>
